<compile_context>
chip_gen: v7x
topology: tpu7x:2x2x1
jax: 0.10.0
libtpu: 0.0.40
codegen_flags: <defaults>
</compile_context>

<pallas_src>
import jax
import jax.numpy as jnp
from jax.experimental import pallas as pl
from jax.experimental.pallas import tpu as pltpu


_SUBLANE = 8
_MIN_LANE = 128
# ~2 MiB of float32 output per block (512K elements).
_TARGET_BLOCK_ELEMS = 512 * 1024


def _cast_kernel(x_ref, o_ref):
    # Elementwise dtype cast: load the tile and store it as float32.
    o_ref[...] = x_ref[...].astype(jnp.float32)


def _choose_lane_width(n_elem: int) -> int:
    # Prefer a wide, lane-dense last dim; only widen when the padding waste
    # (at most one 8 x lane chunk) stays a small fraction of the array.
    for lane in (4096, 2048, 1024, 512, 256):
        if n_elem >= 16 * _SUBLANE * lane:
            return lane
    return _MIN_LANE


def tofp32(x):
    """Cast an array of any dtype to float32 via a Pallas TPU kernel.

    Equivalent to PyTorch `input.float()`.
    """
    x = jnp.asarray(x)
    orig_shape = x.shape
    n_elem = x.size
    in_bytes = jnp.dtype(x.dtype).itemsize

    # torch .float() on an fp32 tensor is the identity; empty arrays have
    # nothing to stream.
    if x.dtype == jnp.float32:
        return x
    if n_elem == 0:
        return x.astype(jnp.float32)

    lane = _choose_lane_width(n_elem)
    chunk = _SUBLANE * lane                      # row-group granularity
    n_pad = (-n_elem) % chunk                    # pad so rows % 8 == 0

    flat = x.reshape(-1)
    if n_pad:
        flat = jnp.pad(flat, (0, n_pad))
    rows = (n_elem + n_pad) // lane
    x2d = flat.reshape(rows, lane)

    # Large row tile (multiple of 8).  Double-buffered VMEM use is
    # 2 * tile_rows * lane * (in_bytes + 4) bytes  (<= ~16 MiB for f64 in).
    tile_rows = max(_SUBLANE, min(rows, _TARGET_BLOCK_ELEMS // lane))
    tile_rows = (tile_rows // _SUBLANE) * _SUBLANE
    grid = (pl.cdiv(rows, tile_rows),)           # Pallas masks the ragged last block

    out = pl.pallas_call(
        _cast_kernel,
        out_shape=jax.ShapeDtypeStruct((rows, lane), jnp.float32),
        grid_spec=pltpu.PrefetchScalarGridSpec(
            num_scalar_prefetch=0,
            grid=grid,
            in_specs=[pl.BlockSpec((tile_rows, lane), lambda i: (i, 0))],
            out_specs=pl.BlockSpec((tile_rows, lane), lambda i: (i, 0)),
        ),
        compiler_params=pltpu.CompilerParams(
            dimension_semantics=("parallel",),
            vmem_limit_bytes=32 * 1024 * 1024,
        ),
        cost_estimate=pl.CostEstimate(
            flops=0,
            transcendentals=0,
            bytes_accessed=n_elem * (in_bytes + 4),
        ),
    )(x2d)

    out_flat = out.reshape(-1)
    if n_pad:
        out_flat = out_flat[:n_elem]
    return out_flat.reshape(orig_shape)


if __name__ == "__main__":
    key = jax.random.PRNGKey(0)

    # Small NCHW activation in half precision (tofp32 in flownet2 converts
    # fp16/bf16 activations back to fp32).
    x = jax.random.normal(key, (2, 4, 16, 16), dtype=jnp.float32).astype(jnp.bfloat16)
    y = jax.block_until_ready(tofp32(x))
    assert y.dtype == jnp.float32, y.dtype
    assert y.shape == x.shape, (y.shape, x.shape)
    assert jnp.array_equal(y, x.astype(jnp.float32)), "mismatch vs reference cast"

    # Awkward size (not a multiple of 128) exercises the padded path.
    x2 = jax.random.normal(jax.random.PRNGKey(1), (3, 5, 7), dtype=jnp.float32).astype(jnp.bfloat16)
    y2 = jax.block_until_ready(tofp32(x2))
    assert y2.dtype == jnp.float32 and y2.shape == x2.shape
    assert jnp.array_equal(y2, x2.astype(jnp.float32)), "mismatch vs reference cast (padded path)"

    # Larger shape to exercise the multi-block grid path.
    x3 = jax.random.normal(jax.random.PRNGKey(2), (2, 64, 96, 128), dtype=jnp.float32).astype(jnp.bfloat16)
    y3 = jax.block_until_ready(tofp32(x3))
    assert y3.dtype == jnp.float32 and y3.shape == x3.shape
    assert jnp.array_equal(y3, x3.astype(jnp.float32)), "mismatch vs reference cast (large path)"

    # Already-float32 input: identity (matches torch .float() semantics).
    x4 = jax.random.normal(jax.random.PRNGKey(3), (4, 8), dtype=jnp.float32)
    y4 = jax.block_until_ready(tofp32(x4))
    assert y4.dtype == jnp.float32 and jnp.array_equal(y4, x4)

    print("KERNEL_OK")
</pallas_src>

<mosaic_0001>
module attributes {stable_mosaic.version = 11 : i64} {
  func.func @_cast_kernel(%arg0: i32, %arg1: memref<16x128xbf16, #tpu.memory_space<vmem>>, %arg2: memref<16x128xf32, #tpu.memory_space<vmem>>) attributes {dimension_semantics = [#tpu.dimension_semantics<parallel>], iteration_bounds = array<i64: 1>, scalar_prefetch = 0 : i64, scratch_operands = 0 : i64, tpu.core_type = #tpu.core_type<tc>, window_params = [{transform_indices = @transform_0, window_bounds = array<i64: 16, 128>}, {transform_indices = @transform_1, window_bounds = array<i64: 16, 128>}]} {
    %c0 = arith.constant 0 : index
    %c0_0 = arith.constant 0 : index
    %0 = vector.load %arg1[%c0, %c0_0] : memref<16x128xbf16, #tpu.memory_space<vmem>>, vector<16x128xbf16>
    %1 = arith.extf %0 : vector<16x128xbf16> to vector<16x128xf32>
    %c0_1 = arith.constant 0 : index
    %c0_2 = arith.constant 0 : index
    %2 = vector.load %arg2[%c0_1, %c0_2] : memref<16x128xf32, #tpu.memory_space<vmem>>, vector<16x128xf32>
    tpu.vector_store %arg2[%c0_1, %c0_2], %1 {strides = array<i32>} : memref<16x128xf32, #tpu.memory_space<vmem>>, vector<16x128xf32>,
    return
  }
  func.func @transform_0(%arg0: i32) -> (i32, i32) {
    %c0_i32 = arith.constant 0 : i32
    %c0_i32_0 = arith.constant 0 : i32
    return %arg0, %c0_i32 : i32, i32
  }
  func.func @transform_1(%arg0: i32) -> (i32, i32) {
    %c0_i32 = arith.constant 0 : i32
    %c0_i32_0 = arith.constant 0 : i32
    return %arg0, %c0_i32 : i32, i32
  }
}

</mosaic_0001>

<llo_original>
// kernel: tpu_custom_call.1
$region0: #{tpu_custom_call.1}
  #allocation0 [shape = 'u32[]', space=smem, size = 0x4, offset = 0x4, fixed_abs, tag = 'smem constant byte address 0x4 - core index']
  #allocation1 [shape = 'u32[144,128]{1,0:T(1,128)}', space=vmem, size = 0x12000, scoped, tag = 'internal scratch']
  %s0 = inlined_call_operand.hbm [shape: bf16[16,128], index: 0, kind: input, shape index: {}]
  %s1 = inlined_call_operand.hbm [shape: f32[16,128], index: 1, kind: output, shape index: {}]
  %s2 = sld [smem:[#allocation0]]
  $region18: #{tpu_custom_call.1} parent=0
    _
  %s4 = ssub.s32 1, %s2
  %s5 = scalar_select 0, %s4, %s2
  $region1: #{tpu_custom_call.1} parent=0
    #allocation2 [shape = 'u8[4096]{0}', space=vmem, size = 0x1000, scoped, tag = 'input window, operand 0, single buffered']
    #allocation3 [shape = 's32[1]{0}', space=sflag, size = 0x4, scoped, tag = 'scoped memory for tpu_custom_call.1']
    #allocation4 [shape = 's32[1]{0}', space=sflag, size = 0x4, scoped, tag = 'scoped memory for tpu_custom_call.1']
    #allocation5 [shape = 'u8[8192]{0}', space=vmem, size = 0x2000, scoped, tag = 'output window, operand 0, single buffered']
    %6 = vsyncpa [#allocation3], 0
    %7 = vsyncpa [#allocation4], 0
    // Predicated region
    $region2: #{tpu_custom_call.1} parent=1 // pred_check
      _
    $region3: #{tpu_custom_call.1} parent=1 // pred_check_branch
      %9 = sbr.rel (0) target = $region5
    $region4: #{tpu_custom_call.1} parent=1 // pred_region
      %s11 = ssub.s32 128, 128
      %12 = vsyncadd [#allocation3], %s11
      %s13 = sshll.u32 [#allocation2], 4
      %s14 = int_to_ptr.vmem [resolvable:$true] %s13
      %19 = dma.hbm_to_vmem [thread:$0]  %s0, 128, %s14, [#allocation3], 64, 64, 4
    $region5: #{tpu_custom_call.1} parent=1 // pred_fallthru
      _
    // Predicated region
    $region6: #{tpu_custom_call.1} parent=1 // pred_check
      _
    $region7: #{tpu_custom_call.1} parent=1 // pred_check_branch
      %21 = sbr.rel (0) target = $region9
    $region8: #{tpu_custom_call.1} parent=1 // pred_region
      %22 = dma.done [#allocation3], 128
    $region9: #{tpu_custom_call.1} parent=1 // pred_fallthru
      _
    %v23 = vld [vmem:[#allocation2] sm:$0xf]
    %v24 = vld [vmem:[#allocation2 + $0x4] sm:$0xf]
    %v25 = vunpack.c.l.bf16 %v23
    %v26 = vunpack.c.l.bf16 %v24
    %27 = vst [vmem:[#allocation5] sm:$0xff] %v25
    %28 = vst [vmem:[#allocation5 + $0x8] sm:$0xff] %v26
    // Predicated region
    $region10: #{tpu_custom_call.1} parent=1 // pred_check
      _
    $region11: #{tpu_custom_call.1} parent=1 // pred_check_branch
      %30 = sbr.rel (0) target = $region13
    $region12: #{tpu_custom_call.1} parent=1 // pred_region
      %s32 = ssub.s32 256, 256
      %33 = vsyncadd [#allocation4], %s32
      %s34 = sshll.u32 [#allocation5], 4
      %s35 = int_to_ptr.vmem [resolvable:$true] %s34
      %40 = dma.vmem_to_hbm [thread:$0]  %s35, 256, %s1, [#allocation4], 128, 128, 8
    $region13: #{tpu_custom_call.1} parent=1 // pred_fallthru
      _
    // Predicated region
    $region14: #{tpu_custom_call.1} parent=1 // pred_check
      _
    $region15: #{tpu_custom_call.1} parent=1 // pred_check_branch
      %42 = sbr.rel (0) target = $region17
    $region16: #{tpu_custom_call.1} parent=1 // pred_region
      %43 = dma.done [#allocation4], 256
    $region17: #{tpu_custom_call.1} parent=1 // pred_fallthru
      _
    %44 = vsyncpa [#allocation3], 1
    %45 = vsyncpa [#allocation4], 1

</llo_original>
